<compile_context>
chip_gen: v7x
topology: tpu7x:2x2x1
jax: 0.10.0
libtpu: 0.0.40
codegen_flags: <defaults>
</compile_context>

<pallas_src>
import functools
import math

import jax
import jax.numpy as jnp
from jax.experimental import pallas as pl
from jax.experimental.pallas import tpu as pltpu


_LANE = 128
_VMEM_BUDGET_BYTES = 8 * 1024 * 1024   # double-buffered (in + out) block budget
_MAX_TC = 1024                          # class-axis tile for the large-C path
_W_TARGET = 512                         # min folded lane width (small-C path)
_W_CAP = 2048                           # max folded lane width (small-C path)
_TARGET_ROW_BLOCKS = 8                  # aim for >=2 row blocks (megacore/pipe)


def _round_up(x, m):
    return ((x + m - 1) // m) * m


def _sublane(itemsize):
    # Sublane granularity per dtype: int8 -> 32, bf16 -> 16, f32/int32 -> 8.
    return max(8, 32 // itemsize)


# ---------------------------------------------------------------------------
# Kernels
# ---------------------------------------------------------------------------

def _one_hot_folded_kernel(lab_ref, e_ref, cls_ref, out_ref):
    # lab_ref: (tm, G) int32   -- G labels folded per output row
    # e_ref:   (G, W) bf16     -- E[g, col] = (col // C == g)  (resident)
    # cls_ref: (1, W) f32      -- cls[col] = col % C           (resident)
    # out_ref: (tm, W)         -- lane-dense folded one-hot block (W = G*C)
    lab = lab_ref[...].astype(jnp.bfloat16)
    # Lane "gather" on the MXU: lab_b[r, col] = labels[r, col // C].
    # Label values < 128 are exact in bf16.
    lab_b = jnp.dot(lab, e_ref[...], preferred_element_type=jnp.float32)
    out_ref[...] = (lab_b == cls_ref[...]).astype(out_ref.dtype)


def _one_hot_wide_kernel(lab_ref, out_ref, *, tc):
    # lab_ref: (tm, 1) int32 (resident across the class axis); out_ref: (tm, tc)
    # Fold the class-tile offset onto the (tm, 1) label side (cheaper than
    # adding it to the full (tm, tc) iota).
    lab_rel = lab_ref[...] - pl.program_id(1) * tc
    cls = jax.lax.broadcasted_iota(jnp.int32, out_ref.shape, 1)
    out_ref[...] = (lab_rel == cls).astype(out_ref.dtype)


# ---------------------------------------------------------------------------
# Tile selection
# ---------------------------------------------------------------------------

def _choose_tm(n_rows, out_row_bytes, in_row_bytes, extra_bytes, sub):
    budget = max(_VMEM_BUDGET_BYTES - extra_bytes, 1 << 20)
    tm = budget // (2 * (out_row_bytes + in_row_bytes))
    # Keep >= _TARGET_ROW_BLOCKS row blocks when N is big enough so v7x's two
    # TensorCores get work and the pipeline stays double-buffered.
    tm = min(tm, _round_up(pl.cdiv(n_rows, _TARGET_ROW_BLOCKS), sub))
    tm = max(sub, (tm // sub) * sub)
    if tm >= n_rows:
        tm = n_rows   # full-extent row block (always a legal block dim)
    return tm


def _choose_fold(n, c):
    """Pick fold factor G for the small-C path.  Returns (G, need_row_pad)."""
    g_full = _LANE // math.gcd(c, _LANE)     # minimal G with (G*C) % 128 == 0
    w_full = g_full * c
    if w_full < _W_TARGET:
        g_ideal = g_full * max(1, _W_TARGET // w_full)
    elif w_full > _W_CAP:
        g_ideal = max(1, _W_CAP // c)        # keep E / row width bounded
    else:
        g_ideal = g_full
    if n % g_ideal == 0:
        return g_ideal, False
    g2 = math.gcd(n, g_ideal)
    if g2 * c >= _LANE:                      # still >= ~50% lane density, no pad
        return g2, False
    return g_ideal, True                     # rare: pad rows, slice after


# ---------------------------------------------------------------------------
# Paths
# ---------------------------------------------------------------------------

def _one_hot_small_c(flat, n, c, dtype, itemsize, sub):
    g, need_pad = _choose_fold(n, c)
    n_pad = _round_up(n, g) if need_pad else n
    if n_pad != n:
        flat = jnp.pad(flat, (0, n_pad - n))
    n_rows = n_pad // g
    w = g * c

    lab2d = flat.reshape(n_rows, g)
    col = jnp.arange(w, dtype=jnp.int32)
    # Expansion ("lane gather") matrix and per-column class id, both resident.
    e = (col[None, :] // c == jnp.arange(g, dtype=jnp.int32)[:, None]
         ).astype(jnp.bfloat16)                                  # (G, W)
    cls = (col % c).astype(jnp.float32)[None, :]                 # (1, W)

    out_row_bytes = _round_up(w, _LANE) * itemsize
    in_row_bytes = _round_up(g, _LANE) * 4
    extra = 2 * (g * _round_up(w, _LANE) * 2 + _round_up(w, _LANE) * 4)
    tm = _choose_tm(n_rows, out_row_bytes, in_row_bytes, extra, sub)

    out = pl.pallas_call(
        _one_hot_folded_kernel,
        out_shape=jax.ShapeDtypeStruct((n_rows, w), dtype),
        grid_spec=pltpu.PrefetchScalarGridSpec(
            num_scalar_prefetch=0,
            grid=(pl.cdiv(n_rows, tm),),
            in_specs=[
                pl.BlockSpec((tm, g), lambda i: (i, 0)),
                pl.BlockSpec((g, w), lambda i: (0, 0)),
                pl.BlockSpec((1, w), lambda i: (0, 0)),
            ],
            out_specs=pl.BlockSpec((tm, w), lambda i: (i, 0)),
        ),
        compiler_params=pltpu.CompilerParams(
            dimension_semantics=("parallel",),
        ),
        cost_estimate=pl.CostEstimate(
            flops=2 * n_pad * c * g + n_pad * c,
            transcendentals=0,
            bytes_accessed=n_pad * c * itemsize + n_pad * 4,
        ),
    )(lab2d, e, cls)

    out = out.reshape(n_pad, c)
    if n_pad != n:
        # TODO(synk): extra slice copy only on the rare ragged-N-with-bad-gcd path.
        out = out[:n]
    return out


def _one_hot_large_c(flat, n, c, dtype, itemsize, sub):
    lab2d = flat.reshape(n, 1)
    tc = c if c <= _MAX_TC else _MAX_TC
    out_row_bytes = _round_up(tc, _LANE) * itemsize
    in_row_bytes = _LANE * 4
    tm = _choose_tm(n, out_row_bytes, in_row_bytes, 0, sub)

    return pl.pallas_call(
        functools.partial(_one_hot_wide_kernel, tc=tc),
        out_shape=jax.ShapeDtypeStruct((n, c), dtype),
        grid_spec=pltpu.PrefetchScalarGridSpec(
            num_scalar_prefetch=0,
            grid=(pl.cdiv(n, tm), pl.cdiv(c, tc)),
            in_specs=[pl.BlockSpec((tm, 1), lambda i, j: (i, 0))],
            out_specs=pl.BlockSpec((tm, tc), lambda i, j: (i, j)),
        ),
        compiler_params=pltpu.CompilerParams(
            dimension_semantics=("parallel", "parallel"),
        ),
        cost_estimate=pl.CostEstimate(
            flops=n * c,
            transcendentals=0,
            bytes_accessed=n * c * itemsize + n * 4,
        ),
    )(lab2d)


# ---------------------------------------------------------------------------
# Public wrapper (== OneHotEncoder.forward)
# ---------------------------------------------------------------------------

@functools.partial(jax.jit, static_argnames=("num_classes", "dtype"))
def one_hot_pallas(labels, num_classes, dtype=jnp.int8):
    """Pallas equivalent of torch.nn.functional.one_hot(labels, num_classes)."""
    orig_shape = labels.shape
    flat = labels.reshape(-1).astype(jnp.int32)
    n = flat.shape[0]
    itemsize = jnp.dtype(dtype).itemsize
    sub = _sublane(itemsize)

    if num_classes < _LANE:
        out2d = _one_hot_small_c(flat, n, num_classes, dtype, itemsize, sub)
    else:
        out2d = _one_hot_large_c(flat, n, num_classes, dtype, itemsize, sub)

    return out2d.reshape(*orig_shape, num_classes)


if __name__ == "__main__":
    num_classes = 10
    batch, seq = 2, 16   # labels shape (2, 16), values in [0, num_classes)

    key = jax.random.PRNGKey(0)
    labels = jax.random.randint(key, (batch, seq), 0, num_classes, dtype=jnp.int32)

    out = one_hot_pallas(labels, num_classes)
    out = jax.block_until_ready(out)

    # Correctness check against plain JAX reference.
    ref = jax.nn.one_hot(labels, num_classes, dtype=out.dtype)
    assert out.shape == (batch, seq, num_classes), out.shape
    assert bool(jnp.all(out == ref)), "one-hot mismatch vs reference"

    print("KERNEL_OK")
</pallas_src>

<mosaic_0001>
module attributes {stable_mosaic.version = 11 : i64} {
  func.func @_one_hot_folded_kernel(%arg0: i32, %arg1: memref<1x32xi32, #tpu.memory_space<vmem>>, %arg2: memref<32x320xbf16, #tpu.memory_space<vmem>>, %arg3: memref<1x320xf32, #tpu.memory_space<vmem>>, %arg4: memref<1x320xi8, #tpu.memory_space<vmem>>) attributes {dimension_semantics = [#tpu.dimension_semantics<parallel>], iteration_bounds = array<i64: 1>, scalar_prefetch = 0 : i64, scratch_operands = 0 : i64, tpu.core_type = #tpu.core_type<tc>, window_params = [{transform_indices = @transform_0, window_bounds = array<i64: 1, 32>}, {pipeline_mode = #tpu.pipeline_mode<synchronous>, transform_indices = @transform_1, window_bounds = array<i64: 32, 320>}, {pipeline_mode = #tpu.pipeline_mode<synchronous>, transform_indices = @transform_2, window_bounds = array<i64: 1, 320>}, {transform_indices = @transform_3, window_bounds = array<i64: 1, 320>}]} {
    %c0 = arith.constant 0 : index
    %c0_0 = arith.constant 0 : index
    %0 = vector.load %arg1[%c0, %c0_0] : memref<1x32xi32, #tpu.memory_space<vmem>>, vector<1x32xi32>
    %1 = arith.sitofp %0 : vector<1x32xi32> to vector<1x32xbf16>
    %c0_1 = arith.constant 0 : index
    %c0_2 = arith.constant 0 : index
    %2 = vector.load %arg2[%c0_1, %c0_2] : memref<32x320xbf16, #tpu.memory_space<vmem>>, vector<32x320xbf16>
    %cst = arith.constant dense<0.000000e+00> : vector<1x320xf32>
    %3 = tpu.matmul %1, %2, %cst {dimension_numbers = #tpu.dot_dimension_numbers<[1], [0], [0], [1], [0, 0, 1, 1], [], []>} : vector<1x32xbf16>, vector<32x320xbf16>, vector<1x320xf32> -> vector<1x320xf32>
    %c0_3 = arith.constant 0 : index
    %c0_4 = arith.constant 0 : index
    %4 = vector.load %arg3[%c0_3, %c0_4] : memref<1x320xf32, #tpu.memory_space<vmem>>, vector<1x320xf32>
    %5 = arith.cmpf oeq, %3, %4 : vector<1x320xf32>
    %6 = arith.extui %5 : vector<1x320xi1> to vector<1x320xi8>
    %c0_5 = arith.constant 0 : index
    %c0_6 = arith.constant 0 : index
    %7 = vector.load %arg4[%c0_5, %c0_6] : memref<1x320xi8, #tpu.memory_space<vmem>>, vector<1x320xi8>
    tpu.vector_store %arg4[%c0_5, %c0_6], %6 {strides = array<i32>} : memref<1x320xi8, #tpu.memory_space<vmem>>, vector<1x320xi8>,
    return
  }
  func.func @transform_0(%arg0: i32) -> (i32, i32) {
    %c0_i32 = arith.constant 0 : i32
    %c0_i32_0 = arith.constant 0 : i32
    return %arg0, %c0_i32 : i32, i32
  }
  func.func @transform_1(%arg0: i32) -> (i32, i32) {
    %c0_i32 = arith.constant 0 : i32
    %c0_i32_0 = arith.constant 0 : i32
    %c0_i32_1 = arith.constant 0 : i32
    return %c0_i32, %c0_i32_0 : i32, i32
  }
  func.func @transform_2(%arg0: i32) -> (i32, i32) {
    %c0_i32 = arith.constant 0 : i32
    %c0_i32_0 = arith.constant 0 : i32
    %c0_i32_1 = arith.constant 0 : i32
    return %c0_i32, %c0_i32_0 : i32, i32
  }
  func.func @transform_3(%arg0: i32) -> (i32, i32) {
    %c0_i32 = arith.constant 0 : i32
    %c0_i32_0 = arith.constant 0 : i32
    return %arg0, %c0_i32 : i32, i32
  }
}

</mosaic_0001>

<llo_original>
// kernel: one_hot_pallas.1
$region0: #{one_hot_pallas.1}
  #allocation0 [shape = 'u32[]', space=smem, size = 0x4, offset = 0x4, fixed_abs, tag = 'smem constant byte address 0x4 - core index']
  #allocation1 [shape = 'u32[144,128]{1,0:T(1,128)}', space=vmem, size = 0x12000, scoped, tag = 'internal scratch']
  %s0 = inlined_call_operand.vmem [shape: s32[1,32], index: 0, kind: input, shape index: {}]
  %s1 = inlined_call_operand.vmem [shape: bf16[32,320], index: 1, kind: input, shape index: {}]
  %s2 = inlined_call_operand.vmem [shape: f32[1,320], index: 2, kind: input, shape index: {}]
  %s3 = inlined_call_operand.vmem [shape: s8[1,320], index: 3, kind: output, shape index: {}]
  %s4 = sld [smem:[#allocation0]]
  $region22: #{one_hot_pallas.1} parent=0
    _
  %s6 = ssub.s32 1, %s4
  %s7 = scalar_select 0, %s6, %s4
  // Predicated region
  $region2: #{one_hot_pallas.1} parent=0 // pred_check
    _
  $region3: #{one_hot_pallas.1} parent=0 // pred_check_branch
    %9 = sbr.rel (0) target = $region5
  $region4: #{one_hot_pallas.1} parent=0 // pred_region
    _
  $region5: #{one_hot_pallas.1} parent=0 // pred_fallthru
    _
  // Predicated region
  $region6: #{one_hot_pallas.1} parent=0 // pred_check
    _
  $region7: #{one_hot_pallas.1} parent=0 // pred_check_branch
    %11 = sbr.rel (0) target = $region9
  $region8: #{one_hot_pallas.1} parent=0 // pred_region
    _
  $region9: #{one_hot_pallas.1} parent=0 // pred_fallthru
    _
  // Predicated region
  $region10: #{one_hot_pallas.1} parent=0 // pred_check
    _
  $region11: #{one_hot_pallas.1} parent=0 // pred_check_branch
    %13 = sbr.rel (0) target = $region13
  $region12: #{one_hot_pallas.1} parent=0 // pred_region
    _
  $region13: #{one_hot_pallas.1} parent=0 // pred_fallthru
    _
  %v17 = vld [vmem:[%s0] sm:$0x1]
  %v18 = vcvt.s32.f32 %v17
  %v19 = vpack.c.bf16 %v18, %v18
  %v20 = vld [vmem:[%s1] sm:$0xff]
  %v21 = vld [vmem:[%s1 + $0x8] sm:$0xf]
  %v22 = vld [vmem:[%s1 + $0xc] sm:$0xff]
  %v23 = vld [vmem:[%s1 + $0x14] sm:$0xf]
  %v24 = vld [vmem:[%s1 + $0x18] sm:$0xff]
  %v25 = vld [vmem:[%s1 + $0x20] sm:$0xf]
  %v26 = vld [vmem:[%s1 + $0x24] sm:$0xff]
  %v27 = vld [vmem:[%s1 + $0x2c] sm:$0xf]
  %v36 = vunpack.c.l.b16 %v20
  %v37 = vunpack.c.h.b16 %v20
  %v38 = vunpack.c.l.b16 %v21
  %v39 = vunpack.c.l.b16 %v22
  %v40 = vunpack.c.h.b16 %v22
  %v41 = vunpack.c.l.b16 %v23
  %v42 = vunpack.c.l.b16 %v24
  %v43 = vunpack.c.h.b16 %v24
  %v44 = vunpack.c.l.b16 %v25
  %v45 = vunpack.c.l.b16 %v26
  %v46 = vunpack.c.h.b16 %v26
  %v47 = vunpack.c.l.b16 %v27
  %v48 = vpack.c.b16 %v39, %v36
  %v49 = vpack.c.b16 %v40, %v37
  %v50 = vpack.c.b16 %v41, %v38
  %v51 = vpack.c.b16 %v45, %v42
  %v52 = vpack.c.b16 %v46, %v43
  %v53 = vpack.c.b16 %v47, %v44
  %vm60 = vcmask 261120
  %v62 = vsel %vm60, %v19, 0
  %64 = vmatprep.subr.bf16.mxu0 %v49
  %65 = vmatpush1.bf16.msra.mxu0 %v48
  %66 = vmatprep.subr.bf16.mxu0 %v52
  %67 = vmatpush1.bf16.msra.mxu0 %v51
  %68 = vmatprep.subr.bf16.mxu0 0
  %69 = vmatpush1.bf16.msra.mxu0 0
  %70 = vmatprep.subr.bf16.mxu0 0
  %71 = vmatpush1.bf16.msra.mxu0 0
  %72 = vmatprep.subr.bf16.mxu0 0
  %73 = vmatpush1.bf16.msra.mxu0 0
  %74 = vmatprep.subr.bf16.mxu0 0
  %75 = vmatpush1.bf16.msra.mxu0 0
  %76 = vmatprep.subr.bf16.mxu0 0
  %77 = vmatpush1.bf16.msra.mxu0 0
  %78 = vmatprep.subr.bf16.mxu0 0
  %79 = vmatpush1.bf16.msra.mxu0 0
  %80 = vmatprep.subr.bf16.mxu0 0
  %81 = vmatpush1.bf16.msra.mxu0 0
  %82 = vmatprep.subr.bf16.mxu0 0
  %83 = vmatpush1.bf16.msra.mxu0 0
  %84 = vmatprep.subr.bf16.mxu0 0
  %85 = vmatpush1.bf16.msra.mxu0 0
  %86 = vmatprep.subr.bf16.mxu0 0
  %87 = vmatpush1.bf16.msra.mxu0 0
  %88 = vmatprep.subr.bf16.mxu0 0
  %89 = vmatpush1.bf16.msra.mxu0 0
  %90 = vmatprep.subr.bf16.mxu0 0
  %91 = vmatpush1.bf16.msra.mxu0 0
  %92 = vmatprep.subr.bf16.mxu0 0
  %93 = vmatpush1.bf16.msra.mxu0 0
  %94 = vmatprep.subr.bf16.mxu0 0
  %95 = vmatpush1.bf16.msra.mxu0 0
  %96 = vmatprep.mubr.bf16.mxu0 0
  %97 = vmatmul.mubr.bf16.gmra.mrb[0].mxu0 %v62
  %v98 = vpop.f32.mrb[0].mxu0
  %v99 = vadd.f32 0.0, %v98
  %v100 = vpop.f32.mrb[0].mxu0
  %v101 = vadd.f32 0.0, %v100
  %v102 = vpop.f32.mrb[0].mxu0
  %v103 = vpop.f32.mrb[0].mxu0
  %104 = vdwg.mxu0
  %105 = vmatprep.subr.bf16.mxu0 0
  %106 = vmatpush1.bf16.msra.mxu0 %v50
  %107 = vmatprep.subr.bf16.mxu0 0
  %108 = vmatpush1.bf16.msra.mxu0 %v53
  %109 = vmatprep.subr.bf16.mxu0 0
  %110 = vmatpush1.bf16.msra.mxu0 0
  %111 = vmatprep.subr.bf16.mxu0 0
  %112 = vmatpush1.bf16.msra.mxu0 0
  %113 = vmatprep.subr.bf16.mxu0 0
  %114 = vmatpush1.bf16.msra.mxu0 0
  %115 = vmatprep.subr.bf16.mxu0 0
  %116 = vmatpush1.bf16.msra.mxu0 0
  %117 = vmatprep.subr.bf16.mxu0 0
  %118 = vmatpush1.bf16.msra.mxu0 0
  %119 = vmatprep.subr.bf16.mxu0 0
  %120 = vmatpush1.bf16.msra.mxu0 0
  %121 = vmatprep.subr.bf16.mxu0 0
  %122 = vmatpush1.bf16.msra.mxu0 0
  %123 = vmatprep.subr.bf16.mxu0 0
  %124 = vmatpush1.bf16.msra.mxu0 0
  %125 = vmatprep.subr.bf16.mxu0 0
  %126 = vmatpush1.bf16.msra.mxu0 0
  %127 = vmatprep.subr.bf16.mxu0 0
  %128 = vmatpush1.bf16.msra.mxu0 0
  %129 = vmatprep.subr.bf16.mxu0 0
  %130 = vmatpush1.bf16.msra.mxu0 0
  %131 = vmatprep.subr.bf16.mxu0 0
  %132 = vmatpush1.bf16.msra.mxu0 0
  %133 = vmatprep.subr.bf16.mxu0 0
  %134 = vmatpush1.bf16.msra.mxu0 0
  %135 = vmatprep.subr.bf16.mxu0 0
  %136 = vmatpush1.bf16.msra.mxu0 0
  %137 = vmatprep.mubr.bf16.mxu0 0
  %138 = vmatmul.mubr.bf16.gmra.mrb[0].mxu0 %v62
  %v139 = vpop.f32.mrb[0].mxu0
  %v140 = vadd.f32 0.0, %v139
  %v141 = vpop.f32.mrb[0].mxu0
  %v142 = vpop.f32.mrb[0].mxu0
  %v143 = vpop.f32.mrb[0].mxu0
  %144 = vdwg.mxu0
  %v145 = vld [vmem:[%s2] sm:$0x7]
  %v147 = vlaneseq
  %v148 = vshrl.u32 %v147, 7
  %v149 = vsub.s32 0, %v148
  %v150 = vrot.slane %v145, %v149
  %v151 = vlaneseq
  %v152 = vshrl.u32 %v151, 7
  %v153 = vsub.s32 1, %v152
  %v154 = vrot.slane %v145, %v153
  %v155 = vlaneseq
  %v156 = vshrl.u32 %v155, 7
  %v157 = vsub.s32 2, %v156
  %v158 = vrot.slane %v145, %v157
  %vm162 = vcmp.eq.f32.partialorder %v99, %v150
  %vm163 = vcmp.eq.f32.partialorder %v101, %v154
  %vm164 = vcmp.eq.f32.partialorder %v140, %v158
  %vm165 = vmpackc.low %vm162, %vm162
  %vm166 = vmpackc.even %vm165, %vm165
  %vm167 = vmpackc.low %vm163, %vm163
  %vm168 = vmpackc.even %vm167, %vm167
  %vm169 = vmpackc.low %vm164, %vm164
  %vm170 = vmpackc.even %vm169, %vm169
  %v171 = vsel %vm166, 16843009, 0
  %v172 = vsel %vm168, 16843009, 0
  %v173 = vsel %vm170, 16843009, 0
  %v174 = vcombine.low %v171, %v172
  %v176 = vunpack.c.l.s4 1966171168
  %v177 = vunpack.c.0.s8 %v176
  %v178 = vlaneseq
  %v179 = vshrl.u32 %v178, 7
  %v180 = vsub.s32 %v177, %v179
  %v181 = vrot.slane %v174, %v180
  %v183 = vunpack.c.l.s4 1966171168
  %v184 = vunpack.c.0.s8 %v183
  %v185 = vlaneseq
  %v186 = vshrl.u32 %v185, 7
  %v187 = vsub.s32 %v184, %v186
  %v188 = vrot.slane %v173, %v187
  %v189 = vcombine.low %v181, %v188
  %v191 = vunpack.c.l.s4 1966171168
  %v192 = vunpack.c.0.s8 %v191
  %v193 = vlaneseq
  %v194 = vshrl.u32 %v193, 7
  %v195 = vsub.s32 %v192, %v194
  %v196 = vrot.slane %v189, %v195
  %vm197 = vcmask 1040384
  %vm198 = vsmask.f32 0
  %vm199 = vmand %vm197, %vm198
  %vm200 = vcmask 1041409
  %vm201 = vsmask.f32 1024
  %vm202 = vmand %vm200, %vm201
  %vm203 = vmor %vm202, %vm199
  %vm204 = vcmask 518146
  %vm205 = vsmask.f32 2048
  %vm206 = vmand %vm204, %vm205
  %vm207 = vmor %vm206, %vm203
  %v208 = vld [vmem:[%s3] sm:$0x7]
  %v209 = vsel %vm207, %v196, %v208
  %210 = vst [vmem:[%s3] sm:$0x7] %v209
  // Predicated region
  $region14: #{one_hot_pallas.1} parent=0 // pred_check
    _
  $region15: #{one_hot_pallas.1} parent=0 // pred_check_branch
    %212 = sbr.rel (0) target = $region17
  $region16: #{one_hot_pallas.1} parent=0 // pred_region
    _
  $region17: #{one_hot_pallas.1} parent=0 // pred_fallthru
    _
  // Predicated region
  $region18: #{one_hot_pallas.1} parent=0 // pred_check
    _
  $region19: #{one_hot_pallas.1} parent=0 // pred_check_branch
    %214 = sbr.rel (0) target = $region21
  $region20: #{one_hot_pallas.1} parent=0 // pred_region
    _
  $region21: #{one_hot_pallas.1} parent=0 // pred_fallthru
    _

</llo_original>
